<compile_context>
chip_gen: v6e
topology: v6e:2x2x1
jax: 0.10.0
libtpu: 0.0.40
codegen_flags: <defaults>
</compile_context>

<pallas_src>
import functools

import jax
import jax.numpy as jnp
from jax.experimental import pallas as pl
from jax.experimental.pallas import tpu as pltpu


def _round_up(x, m):
    return (x + m - 1) // m * m


def e1c1_kernel(x_ref, wp_ref, bp_ref, wc_ref, bc_ref, logits_ref, acc_ref,
                *, inv_seq_len, seq_len, ts, mask_last):
    # x_ref:      [TB, TS, Hd]  encoder hidden-state tile (native dtype)
    # wp_ref:     [Hd, Hd]      pooler weight (f32, resident)
    # bp_ref:     [1,  Hd]      pooler bias   (f32)
    # wc_ref:     [Hd, Lp]      classifier weight (f32, resident)
    # bc_ref:     [1,  Lp]      classifier bias   (f32)
    # logits_ref: [TB, Lp]      f32 output (written on the last S step)
    # acc_ref:    [TB, Hd]      f32 sequence-sum accumulator (VMEM scratch)
    s = pl.program_id(1)

    # Init the accumulator at the start of each sequence sweep.
    @pl.when(s == 0)
    def _():
        acc_ref[...] = jnp.zeros_like(acc_ref)

    # Partial sequence sum of this tile; stream native dtype, accumulate f32.
    xt = x_ref[...].astype(jnp.float32)
    if mask_last:
        # Ragged S: the last tile may contain garbage rows past seq_len.
        valid = jnp.minimum(seq_len - s * ts, ts)
        row = jax.lax.broadcasted_iota(jnp.int32, (1, ts, 1), 1)
        xt = jnp.where(row < valid, xt, 0.0)
    acc_ref[...] += jnp.sum(xt, axis=1)

    # Finalize on the last S step: mean, pooler (MXU + EUP tanh), classifier
    # (MXU), lane-dense store.
    @pl.when(s == pl.num_programs(1) - 1)
    def _():
        pooled_in = acc_ref[...] * inv_seq_len                        # [TB, Hd]
        pooled = jnp.tanh(
            jnp.dot(pooled_in, wp_ref[...],
                    preferred_element_type=jnp.float32) + bp_ref[...])
        logits = (jnp.dot(pooled, wc_ref[...],
                          preferred_element_type=jnp.float32) + bc_ref[...])
        logits_ref[...] = logits.astype(logits_ref.dtype)


def e1c1_forward(hidden_states, w_pool, b_pool, w_cls, b_cls, *, tb=8, ts=512):
    """hidden_states [B,S,H] -> logits [B,L]  (mean-pool + tanh pooler + linear)."""
    B, S, H = hidden_states.shape
    L = w_cls.shape[1]

    # ---- tile / padding selection -------------------------------------------
    h_dim = H if H % 128 == 0 else _round_up(H, 128)      # lane axis of x / pooler
    l_pad = _round_up(L, 128)                             # lane-dense classifier out
    b_pad = _round_up(B, 8)
    tb = min(max(8, _round_up(tb, 8)), b_pad)
    # Keep >= 2 batch blocks whenever possible so the "parallel" batch axis can
    # shard across v7x's two TensorCores.
    while b_pad >= 16 and b_pad // tb < 2 and tb > 8:
        tb = max(8, _round_up(tb // 2, 8))
    b_pad = _round_up(b_pad, tb)

    ts = min(_round_up(ts, 8), _round_up(S, 8))

    # ---- VMEM budget: shrink the S tile until the double-buffered x tile fits
    try:
        vmem_cap = pltpu.get_tpu_info().vmem_capacity_bytes
    except Exception:  # fall back to the smallest per-core VMEM (v7x)
        vmem_cap = 64 * 1024 * 1024
    vmem_limit = min(int(vmem_cap) * 3 // 4, 112 * 1024 * 1024)

    itemsize = jnp.dtype(hidden_states.dtype).itemsize
    fixed_bytes = ((h_dim * h_dim + h_dim * l_pad + 2 * h_dim + 2 * l_pad) * 4 * 2
                   + tb * h_dim * 4 + tb * l_pad * 4 * 2 + (2 << 20))
    while 2 * tb * ts * h_dim * itemsize + fixed_bytes > vmem_limit and ts > 8:
        ts = max(8, _round_up(ts // 2, 8))

    num_s = pl.cdiv(S, ts)
    mask_last = (S % ts) != 0

    # ---- operands: no copy of the big activation in the aligned common case --
    if (b_pad != B) or (h_dim != H):
        x = jnp.pad(hidden_states, ((0, b_pad - B), (0, 0), (0, h_dim - H)))
    else:
        x = hidden_states          # streamed straight from HBM, native dtype

    wp = w_pool.astype(jnp.float32)
    bp = b_pool.astype(jnp.float32).reshape(1, H)
    wc = w_cls.astype(jnp.float32)
    bc = b_cls.astype(jnp.float32).reshape(1, L)
    if h_dim != H:
        wp = jnp.pad(wp, ((0, h_dim - H), (0, h_dim - H)))
        bp = jnp.pad(bp, ((0, 0), (0, h_dim - H)))
        wc = jnp.pad(wc, ((0, h_dim - H), (0, 0)))
    if l_pad != L:
        wc = jnp.pad(wc, ((0, 0), (0, l_pad - L)))
        bc = jnp.pad(bc, ((0, 0), (0, l_pad - L)))

    grid = (b_pad // tb, num_s)
    kernel = functools.partial(e1c1_kernel, inv_seq_len=1.0 / S, seq_len=S,
                               ts=ts, mask_last=mask_last)

    flops = (2 * b_pad * h_dim * h_dim + 2 * b_pad * h_dim * l_pad
             + b_pad * S * h_dim)
    bytes_accessed = (x.size * itemsize
                      + (wp.size + wc.size + bp.size + bc.size) * 4
                      + b_pad * l_pad * 4)

    logits_padded = pl.pallas_call(
        kernel,
        out_shape=jax.ShapeDtypeStruct((b_pad, l_pad), jnp.float32),
        grid_spec=pltpu.PrefetchScalarGridSpec(
            num_scalar_prefetch=0,
            grid=grid,
            in_specs=[
                pl.BlockSpec((tb, ts, h_dim), lambda b, s: (b, s, 0)),  # x tile
                pl.BlockSpec((h_dim, h_dim), lambda b, s: (0, 0)),      # W_pool
                pl.BlockSpec((1, h_dim), lambda b, s: (0, 0)),          # b_pool
                pl.BlockSpec((h_dim, l_pad), lambda b, s: (0, 0)),      # W_cls
                pl.BlockSpec((1, l_pad), lambda b, s: (0, 0)),          # b_cls
            ],
            out_specs=pl.BlockSpec((tb, l_pad), lambda b, s: (b, 0)),
            scratch_shapes=[pltpu.VMEM((tb, h_dim), jnp.float32)],
        ),
        compiler_params=pltpu.CompilerParams(
            dimension_semantics=("parallel", "arbitrary"),
            vmem_limit_bytes=vmem_limit,
        ),
        cost_estimate=pl.CostEstimate(
            flops=flops,
            transcendentals=b_pad * h_dim,
            bytes_accessed=bytes_accessed,
        ),
    )(x, wp, bp, wc, bc)

    return logits_padded[:B, :L]


if __name__ == "__main__":
    # Small shapes consistent with the module: batch=2, seq=8, hidden=32,
    # num_labels=4 (len(label_to_id)).
    B, S, H, L = 2, 8, 32, 4

    key = jax.random.PRNGKey(0)
    k_x, k_wp, k_bp, k_wc, k_bc = jax.random.split(key, 5)

    # TODO(synk): the HuggingFace AutoModel / custom encoder itself is not
    # translated; its output hidden states are synthesized here.
    hidden_states = jax.random.normal(k_x, (B, S, H), dtype=jnp.float32)

    # PyTorch nn.Linear stores [out, in]; build [in, out] for row-major matmul.
    w_pool = jax.random.normal(k_wp, (H, H), dtype=jnp.float32) * 0.02
    b_pool = jax.random.normal(k_bp, (1, H), dtype=jnp.float32) * 0.02
    w_cls = jax.random.normal(k_wc, (H, L), dtype=jnp.float32) * 0.02
    b_cls = jax.random.normal(k_bc, (1, L), dtype=jnp.float32) * 0.02

    fwd = jax.jit(e1c1_forward)
    logits = fwd(hidden_states, w_pool, b_pool, w_cls, b_cls)
    jax.block_until_ready(logits)
    assert logits.shape == (B, L)

    # Full-f32 module semantics (kernel now streams / accumulates in f32).
    pooled = jnp.tanh(jnp.mean(hidden_states, axis=1) @ w_pool + b_pool)
    ref = pooled @ w_cls + b_cls
    assert jnp.allclose(logits, ref, atol=1e-3, rtol=1e-3), (
        float(jnp.max(jnp.abs(logits - ref))))

    # Note: the original forward ends in `assert 1 == 0` (always raises);
    # we implement the intended classification path instead of the raise.
    print("KERNEL_OK")
</pallas_src>

<mosaic_0001>
module attributes {stable_mosaic.version = 11 : i64} {
  func.func @e1c1_kernel(%arg0: i32, %arg1: i32, %arg2: memref<8x8x128xf32, #tpu.memory_space<vmem>>, %arg3: memref<128x128xf32, #tpu.memory_space<vmem>>, %arg4: memref<1x128xf32, #tpu.memory_space<vmem>>, %arg5: memref<128x128xf32, #tpu.memory_space<vmem>>, %arg6: memref<1x128xf32, #tpu.memory_space<vmem>>, %arg7: memref<8x128xf32, #tpu.memory_space<vmem>>, %arg8: memref<8x128xf32, #tpu.memory_space<vmem>>) attributes {dimension_semantics = [#tpu.dimension_semantics<parallel>, #tpu.dimension_semantics<arbitrary>], iteration_bounds = array<i64: 1, 1>, scalar_prefetch = 0 : i64, scratch_operands = 1 : i64, tpu.core_type = #tpu.core_type<tc>, window_params = [{transform_indices = @transform_0, window_bounds = array<i64: 8, 8, 128>}, {pipeline_mode = #tpu.pipeline_mode<synchronous>, transform_indices = @transform_1, window_bounds = array<i64: 128, 128>}, {pipeline_mode = #tpu.pipeline_mode<synchronous>, transform_indices = @transform_2, window_bounds = array<i64: 1, 128>}, {pipeline_mode = #tpu.pipeline_mode<synchronous>, transform_indices = @transform_3, window_bounds = array<i64: 128, 128>}, {pipeline_mode = #tpu.pipeline_mode<synchronous>, transform_indices = @transform_4, window_bounds = array<i64: 1, 128>}, {transform_indices = @transform_5, window_bounds = array<i64: 8, 128>}]} {
    %c0_i32 = arith.constant 0 : i32
    %0 = arith.cmpi eq, %arg1, %c0_i32 : i32
    %1 = arith.extui %0 : i1 to i32
    %c0_i32_0 = arith.constant 0 : i32
    %2 = arith.cmpi ne, %1, %c0_i32_0 : i32
    scf.if %2 {
      %cst_9 = arith.constant 0.000000e+00 : f32
      %11 = vector.broadcast %cst_9 : f32 to vector<8x128xf32>
      %c0_10 = arith.constant 0 : index
      %c0_11 = arith.constant 0 : index
      %12 = vector.load %arg8[%c0_10, %c0_11] : memref<8x128xf32, #tpu.memory_space<vmem>>, vector<8x128xf32>
      tpu.vector_store %arg8[%c0_10, %c0_11], %11 {strides = array<i32>} : memref<8x128xf32, #tpu.memory_space<vmem>>, vector<8x128xf32>,
    } else {
    }
    %c0 = arith.constant 0 : index
    %c0_1 = arith.constant 0 : index
    %c0_2 = arith.constant 0 : index
    %3 = vector.load %arg2[%c0, %c0_1, %c0_2] : memref<8x8x128xf32, #tpu.memory_space<vmem>>, vector<8x8x128xf32>
    %c0_3 = arith.constant 0 : index
    %c0_4 = arith.constant 0 : index
    %4 = vector.load %arg8[%c0_3, %c0_4] : memref<8x128xf32, #tpu.memory_space<vmem>>, vector<8x128xf32>
    %cst = arith.constant dense<0.000000e+00> : vector<8x128xf32>
    %5 = vector.multi_reduction <add>, %3, %cst [1] : vector<8x8x128xf32> to vector<8x128xf32>
    %6 = arith.addf %4, %5 : vector<8x128xf32>
    %c0_5 = arith.constant 0 : index
    %c0_6 = arith.constant 0 : index
    %7 = vector.load %arg8[%c0_5, %c0_6] : memref<8x128xf32, #tpu.memory_space<vmem>>, vector<8x128xf32>
    tpu.vector_store %arg8[%c0_5, %c0_6], %6 {strides = array<i32>} : memref<8x128xf32, #tpu.memory_space<vmem>>, vector<8x128xf32>,
    %c0_i32_7 = arith.constant 0 : i32
    %8 = arith.cmpi eq, %arg1, %c0_i32_7 : i32
    %9 = arith.extui %8 : i1 to i32
    %c0_i32_8 = arith.constant 0 : i32
    %10 = arith.cmpi ne, %9, %c0_i32_8 : i32
    scf.if %10 {
      %c0_9 = arith.constant 0 : index
      %c0_10 = arith.constant 0 : index
      %11 = vector.load %arg8[%c0_9, %c0_10] : memref<8x128xf32, #tpu.memory_space<vmem>>, vector<8x128xf32>
      %cst_11 = arith.constant 1.250000e-01 : f32
      %12 = vector.broadcast %cst_11 : f32 to vector<8x128xf32>
      %13 = arith.mulf %11, %12 : vector<8x128xf32>
      %c0_12 = arith.constant 0 : index
      %c0_13 = arith.constant 0 : index
      %14 = vector.load %arg3[%c0_12, %c0_13] : memref<128x128xf32, #tpu.memory_space<vmem>>, vector<128x128xf32>
      %cst_14 = arith.constant dense<0.000000e+00> : vector<8x128xf32>
      %15 = tpu.matmul %13, %14, %cst_14 {dimension_numbers = #tpu.dot_dimension_numbers<[1], [0], [0], [1], [0, 0, 1, 1], [], []>} : vector<8x128xf32>, vector<128x128xf32>, vector<8x128xf32> -> vector<8x128xf32>
      %c0_15 = arith.constant 0 : index
      %c0_16 = arith.constant 0 : index
      %16 = vector.load %arg4[%c0_15, %c0_16] : memref<1x128xf32, #tpu.memory_space<vmem>>, vector<1x128xf32>
      %17 = vector.broadcast %16 : vector<1x128xf32> to vector<8x128xf32>
      %18 = arith.addf %15, %17 : vector<8x128xf32>
      %19 = math.tanh %18 : vector<8x128xf32>
      %c0_17 = arith.constant 0 : index
      %c0_18 = arith.constant 0 : index
      %20 = vector.load %arg5[%c0_17, %c0_18] : memref<128x128xf32, #tpu.memory_space<vmem>>, vector<128x128xf32>
      %cst_19 = arith.constant dense<0.000000e+00> : vector<8x128xf32>
      %21 = tpu.matmul %19, %20, %cst_19 {dimension_numbers = #tpu.dot_dimension_numbers<[1], [0], [0], [1], [0, 0, 1, 1], [], []>} : vector<8x128xf32>, vector<128x128xf32>, vector<8x128xf32> -> vector<8x128xf32>
      %c0_20 = arith.constant 0 : index
      %c0_21 = arith.constant 0 : index
      %22 = vector.load %arg6[%c0_20, %c0_21] : memref<1x128xf32, #tpu.memory_space<vmem>>, vector<1x128xf32>
      %23 = vector.broadcast %22 : vector<1x128xf32> to vector<8x128xf32>
      %24 = arith.addf %21, %23 : vector<8x128xf32>
      %c0_22 = arith.constant 0 : index
      %c0_23 = arith.constant 0 : index
      %25 = vector.load %arg7[%c0_22, %c0_23] : memref<8x128xf32, #tpu.memory_space<vmem>>, vector<8x128xf32>
      tpu.vector_store %arg7[%c0_22, %c0_23], %24 {strides = array<i32>} : memref<8x128xf32, #tpu.memory_space<vmem>>, vector<8x128xf32>,
    } else {
    }
    return
  }
  func.func @transform_0(%arg0: i32, %arg1: i32) -> (i32, i32, i32) {
    %c0_i32 = arith.constant 0 : i32
    %c0_i32_0 = arith.constant 0 : i32
    return %arg0, %arg1, %c0_i32 : i32, i32, i32
  }
  func.func @transform_1(%arg0: i32, %arg1: i32) -> (i32, i32) {
    %c0_i32 = arith.constant 0 : i32
    %c0_i32_0 = arith.constant 0 : i32
    %c0_i32_1 = arith.constant 0 : i32
    return %c0_i32, %c0_i32_0 : i32, i32
  }
  func.func @transform_2(%arg0: i32, %arg1: i32) -> (i32, i32) {
    %c0_i32 = arith.constant 0 : i32
    %c0_i32_0 = arith.constant 0 : i32
    %c0_i32_1 = arith.constant 0 : i32
    return %c0_i32, %c0_i32_0 : i32, i32
  }
  func.func @transform_3(%arg0: i32, %arg1: i32) -> (i32, i32) {
    %c0_i32 = arith.constant 0 : i32
    %c0_i32_0 = arith.constant 0 : i32
    %c0_i32_1 = arith.constant 0 : i32
    return %c0_i32, %c0_i32_0 : i32, i32
  }
  func.func @transform_4(%arg0: i32, %arg1: i32) -> (i32, i32) {
    %c0_i32 = arith.constant 0 : i32
    %c0_i32_0 = arith.constant 0 : i32
    %c0_i32_1 = arith.constant 0 : i32
    return %c0_i32, %c0_i32_0 : i32, i32
  }
  func.func @transform_5(%arg0: i32, %arg1: i32) -> (i32, i32) {
    %c0_i32 = arith.constant 0 : i32
    %c0_i32_0 = arith.constant 0 : i32
    return %arg0, %c0_i32 : i32, i32
  }
}

</mosaic_0001>

<llo_original>
// kernel: e1c1_forward.1
$region0: #{e1c1_forward.1}
  #allocation0 [shape = 'u32[]', space=smem, size = 0x4, offset = 0x4, fixed_abs, tag = 'smem constant byte address 0x4 - core index']
  #allocation1 [shape = 'u32[144,128]{1,0:T(1,128)}', space=vmem, size = 0x12000, scoped, tag = 'internal scratch']
  #allocation2 [shape = 'f32[8,128]{1,0:T(8,128)}', space=vmem, size = 0x1000, scoped, tag = 'scratch operand']
  %s0 = inlined_call_operand.vmem [shape: f32[8,8,128], index: 0, kind: input, shape index: {}]
  %s1 = inlined_call_operand.vmem [shape: f32[128,128], index: 1, kind: input, shape index: {}]
  %s2 = inlined_call_operand.vmem [shape: f32[1,128], index: 2, kind: input, shape index: {}]
  %s3 = inlined_call_operand.vmem [shape: f32[128,128], index: 3, kind: input, shape index: {}]
  %s4 = inlined_call_operand.vmem [shape: f32[1,128], index: 4, kind: input, shape index: {}]
  %s5 = inlined_call_operand.vmem [shape: f32[8,128], index: 5, kind: output, shape index: {}]
  %s6 = sld [smem:[#allocation0]]
  $region38: #{e1c1_forward.1} parent=0
    _
  %s8 = ssub.s32 1, %s6
  %s9 = scalar_select 0, %s8, %s6
  // Predicated region
  $region2: #{e1c1_forward.1} parent=0 // pred_check
    _
  $region3: #{e1c1_forward.1} parent=0 // pred_check_branch
    %11 = sbr.rel (0) target = $region5
  $region4: #{e1c1_forward.1} parent=0 // pred_region
    _
  $region5: #{e1c1_forward.1} parent=0 // pred_fallthru
    _
  // Predicated region
  $region6: #{e1c1_forward.1} parent=0 // pred_check
    _
  $region7: #{e1c1_forward.1} parent=0 // pred_check_branch
    %13 = sbr.rel (0) target = $region9
  $region8: #{e1c1_forward.1} parent=0 // pred_region
    _
  $region9: #{e1c1_forward.1} parent=0 // pred_fallthru
    _
  // Predicated region
  $region10: #{e1c1_forward.1} parent=0 // pred_check
    _
  $region11: #{e1c1_forward.1} parent=0 // pred_check_branch
    %15 = sbr.rel (0) target = $region13
  $region12: #{e1c1_forward.1} parent=0 // pred_region
    _
  $region13: #{e1c1_forward.1} parent=0 // pred_fallthru
    _
  // Predicated region
  $region14: #{e1c1_forward.1} parent=0 // pred_check
    _
  $region15: #{e1c1_forward.1} parent=0 // pred_check_branch
    %17 = sbr.rel (0) target = $region17
  $region16: #{e1c1_forward.1} parent=0 // pred_region
    _
  $region17: #{e1c1_forward.1} parent=0 // pred_fallthru
    _
  // Predicated region
  $region18: #{e1c1_forward.1} parent=0 // pred_check
    _
  $region19: #{e1c1_forward.1} parent=0 // pred_check_branch
    %19 = sbr.rel (0) target = $region21
  $region20: #{e1c1_forward.1} parent=0 // pred_region
    _
  $region21: #{e1c1_forward.1} parent=0 // pred_fallthru
    _
  %p20 = scmp.eq.s32.totalorder 0, 0
  // Predicated region
  $region22: #{e1c1_forward.1} parent=0 // pred_check
    %p21 = pneg %p20
  $region23: #{e1c1_forward.1} parent=0 // pred_check_branch
    %23 = sbr.rel (%p21) target = $region25
  $region24: #{e1c1_forward.1} parent=0 // pred_region
    %24 = vst [vmem:[#allocation2] sm:$0xff] 0.0
  $region25: #{e1c1_forward.1} parent=0 // pred_fallthru
    _
  %v25 = vld [vmem:[%s0] sm:$0xff]
  %v26 = vld [vmem:[%s0 + $0x8] sm:$0xff]
  %v27 = vld [vmem:[%s0 + $0x10] sm:$0xff]
  %v28 = vld [vmem:[%s0 + $0x18] sm:$0xff]
  %v29 = vld [vmem:[%s0 + $0x20] sm:$0xff]
  %v30 = vld [vmem:[%s0 + $0x28] sm:$0xff]
  %v31 = vld [vmem:[%s0 + $0x30] sm:$0xff]
  %v32 = vld [vmem:[%s0 + $0x38] sm:$0xff]
  %v33 = vld [vmem:[#allocation2] sm:$0xff]
  %v34 = vrot.slane %v25, 4
  %v35 = vadd.f32 %v25, %v34
  %v36 = vrot.slane %v35, 2
  %v37 = vadd.f32 %v35, %v36
  %v38 = vrot.slane %v37, 1
  %v39 = vadd.f32 %v37, %v38
  %v40 = vrot.slane %v26, 4
  %v41 = vadd.f32 %v26, %v40
  %v42 = vrot.slane %v41, 2
  %v43 = vadd.f32 %v41, %v42
  %v44 = vrot.slane %v43, 1
  %v45 = vadd.f32 %v43, %v44
  %v46 = vrot.slane %v27, 4
  %v47 = vadd.f32 %v27, %v46
  %v48 = vrot.slane %v47, 2
  %v49 = vadd.f32 %v47, %v48
  %v50 = vrot.slane %v49, 1
  %v51 = vadd.f32 %v49, %v50
  %v52 = vrot.slane %v28, 4
  %v53 = vadd.f32 %v28, %v52
  %v54 = vrot.slane %v53, 2
  %v55 = vadd.f32 %v53, %v54
  %v56 = vrot.slane %v55, 1
  %v57 = vadd.f32 %v55, %v56
  %v58 = vrot.slane %v29, 4
  %v59 = vadd.f32 %v29, %v58
  %v60 = vrot.slane %v59, 2
  %v61 = vadd.f32 %v59, %v60
  %v62 = vrot.slane %v61, 1
  %v63 = vadd.f32 %v61, %v62
  %v64 = vrot.slane %v30, 4
  %v65 = vadd.f32 %v30, %v64
  %v66 = vrot.slane %v65, 2
  %v67 = vadd.f32 %v65, %v66
  %v68 = vrot.slane %v67, 1
  %v69 = vadd.f32 %v67, %v68
  %v70 = vrot.slane %v31, 4
  %v71 = vadd.f32 %v31, %v70
  %v72 = vrot.slane %v71, 2
  %v73 = vadd.f32 %v71, %v72
  %v74 = vrot.slane %v73, 1
  %v75 = vadd.f32 %v73, %v74
  %v76 = vrot.slane %v32, 4
  %v77 = vadd.f32 %v32, %v76
  %v78 = vrot.slane %v77, 2
  %v79 = vadd.f32 %v77, %v78
  %v80 = vrot.slane %v79, 1
  %v81 = vadd.f32 %v79, %v80
  %vm90 = vcmask 1041409
  %v91 = vsel %vm90, %v45, %v39
  %vm92 = vcmask 1042434
  %v93 = vsel %vm92, %v51, %v91
  %vm94 = vcmask 1043459
  %v95 = vsel %vm94, %v57, %v93
  %vm96 = vcmask 1044484
  %v97 = vsel %vm96, %v63, %v95
  %vm98 = vcmask 1045509
  %v99 = vsel %vm98, %v69, %v97
  %vm100 = vcmask 1046534
  %v101 = vsel %vm100, %v75, %v99
  %vm102 = vcmask 1047559
  %v103 = vsel %vm102, %v81, %v101
  %v105 = vadd.f32 %v33, %v103
  %106 = vst [vmem:[#allocation2] sm:$0xff] %v105
  // Predicated region
  $region26: #{e1c1_forward.1} parent=0 // pred_check
    %p107 = pneg %p20
  $region27: #{e1c1_forward.1} parent=0 // pred_check_branch
    %109 = sbr.rel (%p107) target = $region29
  $region28: #{e1c1_forward.1} parent=0 // pred_region
    %v110 = vld [vmem:[#allocation2] sm:$0xff]
    %v111 = vmul.f32 %v110, 0.125
    %v112 = vld [vmem:[%s1] sm:$0xff]
    %v113 = vld [vmem:[%s1 + $0x8] sm:$0xff]
    %v114 = vld [vmem:[%s1 + $0x10] sm:$0xff]
    %v115 = vld [vmem:[%s1 + $0x18] sm:$0xff]
    %v116 = vld [vmem:[%s1 + $0x20] sm:$0xff]
    %v117 = vld [vmem:[%s1 + $0x28] sm:$0xff]
    %v118 = vld [vmem:[%s1 + $0x30] sm:$0xff]
    %v119 = vld [vmem:[%s1 + $0x38] sm:$0xff]
    %v120 = vld [vmem:[%s1 + $0x40] sm:$0xff]
    %v121 = vld [vmem:[%s1 + $0x48] sm:$0xff]
    %v122 = vld [vmem:[%s1 + $0x50] sm:$0xff]
    %v123 = vld [vmem:[%s1 + $0x58] sm:$0xff]
    %v124 = vld [vmem:[%s1 + $0x60] sm:$0xff]
    %v125 = vld [vmem:[%s1 + $0x68] sm:$0xff]
    %v126 = vld [vmem:[%s1 + $0x70] sm:$0xff]
    %v127 = vld [vmem:[%s1 + $0x78] sm:$0xff]
    %v128 = vld [vmem:[%s2] sm:$0x1]
    %v130 = vlaneseq
    %v131 = vshrl.u32 %v130, 7
    %v132 = vsub.s32 0, %v131
    %v133 = vrot.slane %v128, %v132
    %135 = vmatprep.subr.mxu0 0.0
    %136 = vmatpush1.msra.mxu0 %v127
    %137 = vmatprep.subr.mxu0 0.0
    %138 = vmatpush1.msra.mxu0 %v126
    %139 = vmatprep.subr.mxu0 0.0
    %140 = vmatpush1.msra.mxu0 %v125
    %141 = vmatprep.subr.mxu0 0.0
    %142 = vmatpush1.msra.mxu0 %v124
    %143 = vmatprep.subr.mxu0 0.0
    %144 = vmatpush1.msra.mxu0 %v123
    %145 = vmatprep.subr.mxu0 0.0
    %146 = vmatpush1.msra.mxu0 %v122
    %147 = vmatprep.subr.mxu0 0.0
    %148 = vmatpush1.msra.mxu0 %v121
    %149 = vmatprep.subr.mxu0 0.0
    %150 = vmatpush1.msra.mxu0 %v120
    %151 = vmatprep.subr.mxu0 0.0
    %152 = vmatpush1.msra.mxu0 %v119
    %153 = vmatprep.subr.mxu0 0.0
    %154 = vmatpush1.msra.mxu0 %v118
    %155 = vmatprep.subr.mxu0 0.0
    %156 = vmatpush1.msra.mxu0 %v117
    %157 = vmatprep.subr.mxu0 0.0
    %158 = vmatpush1.msra.mxu0 %v116
    %159 = vmatprep.subr.mxu0 0.0
    %160 = vmatpush1.msra.mxu0 %v115
    %161 = vmatprep.subr.mxu0 0.0
    %162 = vmatpush1.msra.mxu0 %v114
    %163 = vmatprep.subr.mxu0 0.0
    %164 = vmatpush1.msra.mxu0 %v113
    %165 = vmatprep.subr.mxu0 0.0
    %166 = vmatpush1.msra.mxu0 %v112
    %167 = vmatprep.subr.mxu0 0.0
    %168 = vmatpush2.msra.mxu0 0.0
    %169 = vmatprep.subr.mxu0 0.0
    %170 = vmatpush2.msra.mxu0 0.0
    %171 = vmatprep.subr.mxu0 0.0
    %172 = vmatpush2.msra.mxu0 0.0
    %173 = vmatprep.subr.mxu0 0.0
    %174 = vmatpush2.msra.mxu0 0.0
    %175 = vmatprep.subr.mxu0 0.0
    %176 = vmatpush2.msra.mxu0 0.0
    %177 = vmatprep.subr.mxu0 0.0
    %178 = vmatpush2.msra.mxu0 0.0
    %179 = vmatprep.subr.mxu0 0.0
    %180 = vmatpush2.msra.mxu0 0.0
    %181 = vmatprep.subr.mxu0 0.0
    %182 = vmatpush2.msra.mxu0 0.0
    %183 = vmatprep.subr.mxu0 0.0
    %184 = vmatpush2.msra.mxu0 0.0
    %185 = vmatprep.subr.mxu0 0.0
    %186 = vmatpush2.msra.mxu0 0.0
    %187 = vmatprep.subr.mxu0 0.0
    %188 = vmatpush2.msra.mxu0 0.0
    %189 = vmatprep.subr.mxu0 0.0
    %190 = vmatpush2.msra.mxu0 0.0
    %191 = vmatprep.subr.mxu0 0.0
    %192 = vmatpush2.msra.mxu0 0.0
    %193 = vmatprep.subr.mxu0 0.0
    %194 = vmatpush2.msra.mxu0 0.0
    %195 = vmatprep.subr.mxu0 0.0
    %196 = vmatpush2.msra.mxu0 0.0
    %197 = vmatprep.subr.mxu0 0.0
    %198 = vmatpush2.msra.mxu0 0.0
    %199 = vmatprep.mubr.f32.mxu0 0.0
    %200 = vmatmul.mubr.f32.gmra.mxu0 %v111
    %v201 = vpop.f32.mrf.mxu0
    %v202 = vadd.f32 %v133, %v201
    %v203 = vpop.f32.mrf.mxu0
    %204 = vdwg.mxu0
    %v205 = vtanh.pop %v202
    %v206 = vld [vmem:[%s3] sm:$0xff]
    %v207 = vld [vmem:[%s3 + $0x8] sm:$0xff]
    %v208 = vld [vmem:[%s3 + $0x10] sm:$0xff]
    %v209 = vld [vmem:[%s3 + $0x18] sm:$0xff]
    %v210 = vld [vmem:[%s3 + $0x20] sm:$0xff]
    %v211 = vld [vmem:[%s3 + $0x28] sm:$0xff]
    %v212 = vld [vmem:[%s3 + $0x30] sm:$0xff]
    %v213 = vld [vmem:[%s3 + $0x38] sm:$0xff]
    %v214 = vld [vmem:[%s3 + $0x40] sm:$0xff]
    %v215 = vld [vmem:[%s3 + $0x48] sm:$0xff]
    %v216 = vld [vmem:[%s3 + $0x50] sm:$0xff]
    %v217 = vld [vmem:[%s3 + $0x58] sm:$0xff]
    %v218 = vld [vmem:[%s3 + $0x60] sm:$0xff]
    %v219 = vld [vmem:[%s3 + $0x68] sm:$0xff]
    %v220 = vld [vmem:[%s3 + $0x70] sm:$0xff]
    %v221 = vld [vmem:[%s3 + $0x78] sm:$0xff]
    %v222 = vld [vmem:[%s4] sm:$0x1]
    %v224 = vlaneseq
    %v225 = vshrl.u32 %v224, 7
    %v226 = vsub.s32 0, %v225
    %v227 = vrot.slane %v222, %v226
    %229 = vmatprep.subr.mxu0 0.0
    %230 = vmatpush1.msra.mxu0 %v221
    %231 = vmatprep.subr.mxu0 0.0
    %232 = vmatpush1.msra.mxu0 %v220
    %233 = vmatprep.subr.mxu0 0.0
    %234 = vmatpush1.msra.mxu0 %v219
    %235 = vmatprep.subr.mxu0 0.0
    %236 = vmatpush1.msra.mxu0 %v218
    %237 = vmatprep.subr.mxu0 0.0
    %238 = vmatpush1.msra.mxu0 %v217
    %239 = vmatprep.subr.mxu0 0.0
    %240 = vmatpush1.msra.mxu0 %v216
    %241 = vmatprep.subr.mxu0 0.0
    %242 = vmatpush1.msra.mxu0 %v215
    %243 = vmatprep.subr.mxu0 0.0
    %244 = vmatpush1.msra.mxu0 %v214
    %245 = vmatprep.subr.mxu0 0.0
    %246 = vmatpush1.msra.mxu0 %v213
    %247 = vmatprep.subr.mxu0 0.0
    %248 = vmatpush1.msra.mxu0 %v212
    %249 = vmatprep.subr.mxu0 0.0
    %250 = vmatpush1.msra.mxu0 %v211
    %251 = vmatprep.subr.mxu0 0.0
    %252 = vmatpush1.msra.mxu0 %v210
    %253 = vmatprep.subr.mxu0 0.0
    %254 = vmatpush1.msra.mxu0 %v209
    %255 = vmatprep.subr.mxu0 0.0
    %256 = vmatpush1.msra.mxu0 %v208
    %257 = vmatprep.subr.mxu0 0.0
    %258 = vmatpush1.msra.mxu0 %v207
    %259 = vmatprep.subr.mxu0 0.0
    %260 = vmatpush1.msra.mxu0 %v206
    %261 = vmatprep.subr.mxu0 0.0
    %262 = vmatpush2.msra.mxu0 0.0
    %263 = vmatprep.subr.mxu0 0.0
    %264 = vmatpush2.msra.mxu0 0.0
    %265 = vmatprep.subr.mxu0 0.0
    %266 = vmatpush2.msra.mxu0 0.0
    %267 = vmatprep.subr.mxu0 0.0
    %268 = vmatpush2.msra.mxu0 0.0
    %269 = vmatprep.subr.mxu0 0.0
    %270 = vmatpush2.msra.mxu0 0.0
    %271 = vmatprep.subr.mxu0 0.0
    %272 = vmatpush2.msra.mxu0 0.0
    %273 = vmatprep.subr.mxu0 0.0
    %274 = vmatpush2.msra.mxu0 0.0
    %275 = vmatprep.subr.mxu0 0.0
    %276 = vmatpush2.msra.mxu0 0.0
    %277 = vmatprep.subr.mxu0 0.0
    %278 = vmatpush2.msra.mxu0 0.0
    %279 = vmatprep.subr.mxu0 0.0
    %280 = vmatpush2.msra.mxu0 0.0
    %281 = vmatprep.subr.mxu0 0.0
    %282 = vmatpush2.msra.mxu0 0.0
    %283 = vmatprep.subr.mxu0 0.0
    %284 = vmatpush2.msra.mxu0 0.0
    %285 = vmatprep.subr.mxu0 0.0
    %286 = vmatpush2.msra.mxu0 0.0
    %287 = vmatprep.subr.mxu0 0.0
    %288 = vmatpush2.msra.mxu0 0.0
    %289 = vmatprep.subr.mxu0 0.0
    %290 = vmatpush2.msra.mxu0 0.0
    %291 = vmatprep.subr.mxu0 0.0
    %292 = vmatpush2.msra.mxu0 0.0
    %293 = vmatprep.mubr.f32.mxu0 0.0
    %294 = vmatmul.mubr.f32.gmra.mxu0 %v205
    %v295 = vpop.f32.mrf.mxu0
    %v296 = vadd.f32 %v227, %v295
    %v297 = vpop.f32.mrf.mxu0
    %298 = vdwg.mxu0
    %299 = vst [vmem:[%s5] sm:$0xff] %v296
  $region29: #{e1c1_forward.1} parent=0 // pred_fallthru
    _
  // Predicated region
  $region30: #{e1c1_forward.1} parent=0 // pred_check
    _
  $region31: #{e1c1_forward.1} parent=0 // pred_check_branch
    %301 = sbr.rel (0) target = $region33
  $region32: #{e1c1_forward.1} parent=0 // pred_region
    _
  $region33: #{e1c1_forward.1} parent=0 // pred_fallthru
    _
  // Predicated region
  $region34: #{e1c1_forward.1} parent=0 // pred_check
    _
  $region35: #{e1c1_forward.1} parent=0 // pred_check_branch
    %303 = sbr.rel (0) target = $region37
  $region36: #{e1c1_forward.1} parent=0 // pred_region
    _
  $region37: #{e1c1_forward.1} parent=0 // pred_fallthru
    _

</llo_original>
